<compile_context>
chip_gen: v5e
topology: v5e:2x2
jax: 0.10.0
libtpu: 0.0.40
codegen_flags: <defaults>
</compile_context>

<pallas_src>
import jax
import jax.numpy as jnp
from jax.experimental import pallas as pl
from jax.experimental.pallas import tpu as pltpu


def _round_up(a: int, b: int) -> int:
    return ((a + b - 1) // b) * b


def _cdiv(a: int, b: int) -> int:
    return (a + b - 1) // b


# ---------------------------------------------------------------------------
# Kernels
# ---------------------------------------------------------------------------
def dense_kernel_single_k(x_ref, w_ref, b_ref, o_ref):
    """K fits in one tile: no accumulator scratch, fused bias+sigmoid epilogue."""
    z = jnp.dot(x_ref[...], w_ref[...], preferred_element_type=jnp.float32)
    z = z + b_ref[...].astype(jnp.float32)
    o_ref[...] = jax.nn.sigmoid(z).astype(o_ref.dtype)


def dense_kernel_multi_k(x_ref, w_ref, b_ref, o_ref, acc_ref):
    """K tiled: f32 VMEM accumulator, epilogue on the last K step."""
    k = pl.program_id(2)

    @pl.when(k == 0)
    def _init():
        acc_ref[...] = jnp.zeros_like(acc_ref)

    acc_ref[...] += jnp.dot(x_ref[...], w_ref[...],
                            preferred_element_type=jnp.float32)

    @pl.when(k == pl.num_programs(2) - 1)
    def _finalize():
        z = acc_ref[...] + b_ref[...].astype(jnp.float32)
        o_ref[...] = jax.nn.sigmoid(z).astype(o_ref.dtype)


# ---------------------------------------------------------------------------
# Tile selection
# ---------------------------------------------------------------------------
def _choose_tiles(M: int, N: int, K: int, in_bytes: int):
    sub = 16 if in_bytes == 2 else 8            # sublane packing (bf16 vs f32)

    # K: single step when it fits; otherwise balanced tiles (no padded-K waste).
    tk_cap = 1024 if in_bytes == 2 else 512
    kp128 = _round_up(K, 128)
    if kp128 <= tk_cap:
        tk = kp128
    else:
        nk = _cdiv(kp128, tk_cap)
        tk = _round_up(_cdiv(kp128, nk), 128)

    # M/N: target 512-wide output tiles, clamped to the (padded) problem.
    tm = max(sub, min(512, _round_up(M, sub)))
    tn = max(128, min(512, _round_up(N, 128)))

    # Keep >= 2 parallel MxN blocks when the problem allows (v7x: 2 TensorCores).
    while _cdiv(M, tm) * _cdiv(N, tn) < 2:
        if tn >= tm and tn >= 2 * 128:
            tn = _round_up(max(128, tn // 2), 128)
        elif tm >= 2 * sub:
            tm = _round_up(max(sub, tm // 2), sub)
        elif tn >= 2 * 128:
            tn = _round_up(max(128, tn // 2), 128)
        else:
            break                                # tiny problem: one tile total
    return tm, tn, tk


# ---------------------------------------------------------------------------
# Wrapper
# ---------------------------------------------------------------------------
def dense_layer(x, weights, bias, *, use_bf16_compute=True,
                vmem_limit_cap=48 * 1024 * 1024):
    """y = sigmoid(x @ weights + bias), tiled for the TPU MXU.

    Default: bf16 operands with f32 MXU accumulation (native fast path on
    v5e/v6e/v7x).  Pass use_bf16_compute=False for full-f32 operands.
    """
    M, K = x.shape
    K2, N = weights.shape
    assert K == K2 and bias.shape == (1, N)

    out_dtype = x.dtype
    compute_dtype = jnp.bfloat16 if use_bf16_compute else x.dtype
    in_bytes = jnp.dtype(compute_dtype).itemsize

    # Cast ONCE here so the kernel's pipelined DMAs move compute-dtype bytes.
    # Bias stays f32 for the epilogue add.
    if x.dtype != compute_dtype:
        x = x.astype(compute_dtype)
    if weights.dtype != compute_dtype:
        weights = weights.astype(compute_dtype)
    bias = bias.astype(jnp.float32)

    tm, tn, tk = _choose_tiles(M, N, K, in_bytes)
    Mp, Np, Kp = _round_up(M, tm), _round_up(N, tn), _round_up(K, tk)

    # Zero-pad ragged dims (padded K contributes 0; padded M/N sliced off below).
    # TODO(synk): for repeated inference, pre-pad/pre-cast W and bias once
    # outside this call instead of re-padding every forward pass.
    if (Mp, Kp) != (M, K):
        x = jnp.pad(x, ((0, Mp - M), (0, Kp - K)))
    if (Kp, Np) != (K, N):
        weights = jnp.pad(weights, ((0, Kp - K), (0, Np - N)))
    if Np != N:
        bias = jnp.pad(bias, ((0, 0), (0, Np - N)))

    grid_k = Kp // tk
    out_bytes = jnp.dtype(out_dtype).itemsize
    vmem_bytes = (2 * (tm * tk + tk * tn) * in_bytes     # double-buffered x, W
                  + 2 * tm * tn * out_bytes              # double-buffered out
                  + 2 * tn * 4                           # bias tiles
                  + (tm * tn * 4 if grid_k > 1 else 0))  # f32 accumulator
    vmem_limit = int(min(vmem_limit_cap, max(2 * vmem_bytes, 8 * 1024 * 1024)))

    if grid_k == 1:
        out_padded = pl.pallas_call(
            dense_kernel_single_k,
            out_shape=jax.ShapeDtypeStruct((Mp, Np), out_dtype),
            grid=(Mp // tm, Np // tn),
            in_specs=[
                pl.BlockSpec((tm, Kp), lambda i, j: (i, 0)),   # x row tile
                pl.BlockSpec((Kp, tn), lambda i, j: (0, j)),   # W col tile
                pl.BlockSpec((1, tn), lambda i, j: (0, j)),    # bias col tile
            ],
            out_specs=pl.BlockSpec((tm, tn), lambda i, j: (i, j)),
            compiler_params=pltpu.CompilerParams(
                dimension_semantics=("parallel", "parallel"),
                vmem_limit_bytes=vmem_limit,
            ),
        )(x, weights, bias)
    else:
        out_padded = pl.pallas_call(
            dense_kernel_multi_k,
            out_shape=jax.ShapeDtypeStruct((Mp, Np), out_dtype),
            grid=(Mp // tm, Np // tn, grid_k),
            in_specs=[
                pl.BlockSpec((tm, tk), lambda i, j, k: (i, k)),  # x row/K tile
                pl.BlockSpec((tk, tn), lambda i, j, k: (k, j)),  # W K/col tile
                pl.BlockSpec((1, tn), lambda i, j, k: (0, j)),   # bias col tile
            ],
            out_specs=pl.BlockSpec((tm, tn), lambda i, j, k: (i, j)),
            scratch_shapes=[pltpu.VMEM((tm, tn), jnp.float32)],
            compiler_params=pltpu.CompilerParams(
                dimension_semantics=("parallel", "parallel", "arbitrary"),
                vmem_limit_bytes=vmem_limit,
            ),
        )(x, weights, bias)

    return out_padded[:M, :N]


if __name__ == "__main__":
    def make_inputs(key, batch, input_size, output_size):
        kx, kw, kb = jax.random.split(key, 3)
        x = jax.random.normal(kx, (batch, input_size), dtype=jnp.float32)
        w = jax.random.normal(kw, (input_size, output_size), dtype=jnp.float32)
        b = jax.random.normal(kb, (1, output_size), dtype=jnp.float32)
        return x, w, b

    def ref_bf16(x, w, b):
        z = jnp.dot(x.astype(jnp.bfloat16), w.astype(jnp.bfloat16),
                    preferred_element_type=jnp.float32) + b
        return jax.nn.sigmoid(z)

    # 1) Small module-sized problem (batch=8, input=32, output=32): single-K
    #    fast-path kernel, bf16 default compute, exercises the padding path.
    x, w, b = make_inputs(jax.random.PRNGKey(0), 8, 32, 32)
    y = dense_layer(x, w, b)
    jax.block_until_ready(y)
    assert y.shape == (8, 32) and y.dtype == jnp.float32
    assert jnp.allclose(y, ref_bf16(x, w, b), atol=2e-3, rtol=2e-3)

    # 2) Larger problem exercising the multi-K accumulator path and the
    #    parallel M/N grid (K=1536 > 1024 -> two balanced 768-wide K steps).
    x2, w2, b2 = make_inputs(jax.random.PRNGKey(0), 256, 1536, 512)
    y2 = dense_layer(x2, w2, b2)
    jax.block_until_ready(y2)
    assert jnp.allclose(y2, ref_bf16(x2, w2, b2), atol=2e-3, rtol=2e-3)

    # 3) f32 operand path (kept for exactness-sensitive callers).
    y3 = dense_layer(x, w, b, use_bf16_compute=False)
    jax.block_until_ready(y3)
    y3_ref = jax.nn.sigmoid(x @ w + b)
    assert jnp.allclose(y3, y3_ref, atol=1e-5, rtol=1e-5)

    print("KERNEL_OK")
</pallas_src>

<mosaic_0001>
module attributes {stable_mosaic.version = 11 : i64} {
  func.func @dense_kernel_single_k(%arg0: i32, %arg1: i32, %arg2: memref<16x128xbf16, #tpu.memory_space<vmem>>, %arg3: memref<128x128xbf16, #tpu.memory_space<vmem>>, %arg4: memref<1x128xf32, #tpu.memory_space<vmem>>, %arg5: memref<16x128xf32, #tpu.memory_space<vmem>>) attributes {dimension_semantics = [#tpu.dimension_semantics<parallel>, #tpu.dimension_semantics<parallel>], iteration_bounds = array<i64: 1, 1>, scalar_prefetch = 0 : i64, scratch_operands = 0 : i64, tpu.core_type = #tpu.core_type<tc>, window_params = [{transform_indices = @transform_0, window_bounds = array<i64: 16, 128>}, {transform_indices = @transform_1, window_bounds = array<i64: 128, 128>}, {transform_indices = @transform_2, window_bounds = array<i64: 1, 128>}, {transform_indices = @transform_3, window_bounds = array<i64: 16, 128>}]} {
    %c0 = arith.constant 0 : index
    %c0_0 = arith.constant 0 : index
    %0 = vector.load %arg2[%c0, %c0_0] : memref<16x128xbf16, #tpu.memory_space<vmem>>, vector<16x128xbf16>
    %c0_1 = arith.constant 0 : index
    %c0_2 = arith.constant 0 : index
    %1 = vector.load %arg3[%c0_1, %c0_2] : memref<128x128xbf16, #tpu.memory_space<vmem>>, vector<128x128xbf16>
    %cst = arith.constant dense<0.000000e+00> : vector<16x128xf32>
    %2 = tpu.matmul %0, %1, %cst {dimension_numbers = #tpu.dot_dimension_numbers<[1], [0], [0], [1], [0, 0, 1, 1], [], []>} : vector<16x128xbf16>, vector<128x128xbf16>, vector<16x128xf32> -> vector<16x128xf32>
    %c0_3 = arith.constant 0 : index
    %c0_4 = arith.constant 0 : index
    %3 = vector.load %arg4[%c0_3, %c0_4] : memref<1x128xf32, #tpu.memory_space<vmem>>, vector<1x128xf32>
    %4 = vector.broadcast %3 : vector<1x128xf32> to vector<16x128xf32>
    %5 = arith.addf %2, %4 : vector<16x128xf32>
    %6 = arith.negf %5 : vector<16x128xf32>
    %7 = math.exp %6 : vector<16x128xf32>
    %cst_5 = arith.constant 1.000000e+00 : f32
    %8 = vector.broadcast %cst_5 : f32 to vector<16x128xf32>
    %9 = arith.addf %8, %7 : vector<16x128xf32>
    %10 = arith.divf %8, %9 : vector<16x128xf32>
    %c0_6 = arith.constant 0 : index
    %c0_7 = arith.constant 0 : index
    %11 = vector.load %arg5[%c0_6, %c0_7] : memref<16x128xf32, #tpu.memory_space<vmem>>, vector<16x128xf32>
    tpu.vector_store %arg5[%c0_6, %c0_7], %10 {strides = array<i32>} : memref<16x128xf32, #tpu.memory_space<vmem>>, vector<16x128xf32>,
    return
  }
  func.func @transform_0(%arg0: i32, %arg1: i32) -> (i32, i32) {
    %c0_i32 = arith.constant 0 : i32
    %c0_i32_0 = arith.constant 0 : i32
    return %arg0, %c0_i32 : i32, i32
  }
  func.func @transform_1(%arg0: i32, %arg1: i32) -> (i32, i32) {
    %c0_i32 = arith.constant 0 : i32
    %c0_i32_0 = arith.constant 0 : i32
    return %c0_i32, %arg1 : i32, i32
  }
  func.func @transform_2(%arg0: i32, %arg1: i32) -> (i32, i32) {
    %c0_i32 = arith.constant 0 : i32
    %c0_i32_0 = arith.constant 0 : i32
    return %c0_i32, %arg1 : i32, i32
  }
  func.func @transform_3(%arg0: i32, %arg1: i32) -> (i32, i32) {
    %c0_i32 = arith.constant 0 : i32
    return %arg0, %arg1 : i32, i32
  }
}

</mosaic_0001>

<llo_original>
// kernel: tpu_custom_call.1
$region0: #{tpu_custom_call.1}
  #allocation0 [shape = 'u32[]', space=smem, size = 0x4, offset = 0x4, fixed_abs, tag = 'smem constant byte address 0x4 - core index']
  #allocation1 [shape = 'u32[72,128]{1,0:T(1,128)}', space=vmem, size = 0x9000, scoped, tag = 'internal scratch']
  %s0 = inlined_call_operand.hbm [shape: bf16[16,128], index: 0, kind: input, shape index: {}]
  %s1 = inlined_call_operand.hbm [shape: bf16[128,128], index: 1, kind: input, shape index: {}]
  %s2 = inlined_call_operand.vmem [shape: f32[1,128], index: 2, kind: input, shape index: {}]
  %s3 = inlined_call_operand.hbm [shape: f32[16,128], index: 3, kind: output, shape index: {}]
  %s4 = sld [smem:[#allocation0]]
  $region30: #{tpu_custom_call.1} parent=0
    _
  %s6 = ssub.s32 1, %s4
  %s7 = scalar_select 0, %s6, %s4
  $region1: #{tpu_custom_call.1} parent=0
    #allocation2 [shape = 'u8[4096]{0}', space=vmem, size = 0x1000, scoped, tag = 'input window, operand 0, single buffered']
    #allocation3 [shape = 's32[1]{0}', space=sflag, size = 0x4, scoped, tag = 'scoped memory for tpu_custom_call.1']
    #allocation4 [shape = 's32[1]{0}', space=sflag, size = 0x4, scoped, tag = 'scoped memory for tpu_custom_call.1']
    #allocation5 [shape = 'u8[32768]{0}', space=vmem, size = 0x8000, scoped, tag = 'input window, operand 1, single buffered']
    #allocation6 [shape = 's32[1]{0}', space=sflag, size = 0x4, scoped, tag = 'scoped memory for tpu_custom_call.1']
    #allocation7 [shape = 'u8[8192]{0}', space=vmem, size = 0x2000, scoped, tag = 'output window, operand 0, single buffered']
    %8 = vsyncpa [#allocation3], 0
    %9 = vsyncpa [#allocation6], 0
    %10 = vsyncpa [#allocation4], 0
    // Predicated region
    $region2: #{tpu_custom_call.1} parent=1 // pred_check
      _
    $region3: #{tpu_custom_call.1} parent=1 // pred_check_branch
      %12 = sbr.rel (0) target = $region5
    $region4: #{tpu_custom_call.1} parent=1 // pred_region
      %14 = vsyncadd [#allocation3], 0
      %s15 = sshll.u32 %s0, 4
      %s16 = int_to_ptr.hbm [resolvable:$true] %s15
      %s17 = sshll.u32 [#allocation2], 4
      %s18 = int_to_ptr.vmem [resolvable:$true] %s17
      %23 = dma.hbm_to_vmem [thread:$0]  %s16, 128, %s18, [#allocation3], 64, 64, 4
    $region5: #{tpu_custom_call.1} parent=1 // pred_fallthru
      _
    // Predicated region
    $region6: #{tpu_custom_call.1} parent=1 // pred_check
      _
    $region7: #{tpu_custom_call.1} parent=1 // pred_check_branch
      %25 = sbr.rel (0) target = $region9
    $region8: #{tpu_custom_call.1} parent=1 // pred_region
      %27 = vsyncadd [#allocation6], 0
      %s28 = sshll.u32 %s1, 4
      %s29 = int_to_ptr.hbm [resolvable:$true] %s28
      %s30 = sshll.u32 [#allocation5], 4
      %s31 = int_to_ptr.vmem [resolvable:$true] %s30
      %36 = dma.hbm_to_vmem [thread:$0]  %s29, 1024, %s31, [#allocation6], 64, 64, 4
    $region9: #{tpu_custom_call.1} parent=1 // pred_fallthru
      _
    // Predicated region
    $region10: #{tpu_custom_call.1} parent=1 // pred_check
      _
    $region11: #{tpu_custom_call.1} parent=1 // pred_check_branch
      %38 = sbr.rel (0) target = $region13
    $region12: #{tpu_custom_call.1} parent=1 // pred_region
      _
    $region13: #{tpu_custom_call.1} parent=1 // pred_fallthru
      _
    // Predicated region
    $region14: #{tpu_custom_call.1} parent=1 // pred_check
      _
    $region15: #{tpu_custom_call.1} parent=1 // pred_check_branch
      %40 = sbr.rel (0) target = $region17
    $region16: #{tpu_custom_call.1} parent=1 // pred_region
      %42 = dma.done [#allocation3], 128
    $region17: #{tpu_custom_call.1} parent=1 // pred_fallthru
      _
    // Predicated region
    $region18: #{tpu_custom_call.1} parent=1 // pred_check
      _
    $region19: #{tpu_custom_call.1} parent=1 // pred_check_branch
      %44 = sbr.rel (0) target = $region21
    $region20: #{tpu_custom_call.1} parent=1 // pred_region
      %46 = dma.done [#allocation6], 1024
    $region21: #{tpu_custom_call.1} parent=1 // pred_fallthru
      _
    %v47 = vld [vmem:[#allocation2] sm:$0xf]
    %v48 = vld [vmem:[#allocation2 + $0x4] sm:$0xf]
    %v49 = vld [vmem:[#allocation5] sm:$0xf]
    %v50 = vld [vmem:[#allocation5 + $0x4] sm:$0xf]
    %v51 = vld [vmem:[#allocation5 + $0x8] sm:$0xf]
    %v52 = vld [vmem:[#allocation5 + $0xc] sm:$0xf]
    %v53 = vld [vmem:[#allocation5 + $0x10] sm:$0xf]
    %v54 = vld [vmem:[#allocation5 + $0x14] sm:$0xf]
    %v55 = vld [vmem:[#allocation5 + $0x18] sm:$0xf]
    %v56 = vld [vmem:[#allocation5 + $0x1c] sm:$0xf]
    %v57 = vld [vmem:[#allocation5 + $0x20] sm:$0xf]
    %v58 = vld [vmem:[#allocation5 + $0x24] sm:$0xf]
    %v59 = vld [vmem:[#allocation5 + $0x28] sm:$0xf]
    %v60 = vld [vmem:[#allocation5 + $0x2c] sm:$0xf]
    %v61 = vld [vmem:[#allocation5 + $0x30] sm:$0xf]
    %v62 = vld [vmem:[#allocation5 + $0x34] sm:$0xf]
    %v63 = vld [vmem:[#allocation5 + $0x38] sm:$0xf]
    %v64 = vld [vmem:[#allocation5 + $0x3c] sm:$0xf]
    %v65 = vld [vmem:[%s2] sm:$0x1]
    %v67 = vperm.slane %v65, 0
    %v71 = vunpack.c.l.b16 %v47
    %v72 = vunpack.c.l.b16 %v48
    %v73 = vpack.c.b16 %v72, %v71
    %v91 = vunpack.c.l.b16 %v49
    %v92 = vunpack.c.l.b16 %v50
    %v93 = vunpack.c.l.b16 %v51
    %v94 = vunpack.c.l.b16 %v52
    %v95 = vunpack.c.l.b16 %v53
    %v96 = vunpack.c.l.b16 %v54
    %v97 = vunpack.c.l.b16 %v55
    %v98 = vunpack.c.l.b16 %v56
    %v99 = vunpack.c.l.b16 %v57
    %v100 = vunpack.c.l.b16 %v58
    %v101 = vunpack.c.l.b16 %v59
    %v102 = vunpack.c.l.b16 %v60
    %v103 = vunpack.c.l.b16 %v61
    %v104 = vunpack.c.l.b16 %v62
    %v105 = vunpack.c.l.b16 %v63
    %v106 = vunpack.c.l.b16 %v64
    %v107 = vpack.c.b16 %v92, %v91
    %v108 = vpack.c.b16 %v94, %v93
    %v109 = vpack.c.b16 %v96, %v95
    %v110 = vpack.c.b16 %v98, %v97
    %v111 = vpack.c.b16 %v100, %v99
    %v112 = vpack.c.b16 %v102, %v101
    %v113 = vpack.c.b16 %v104, %v103
    %v114 = vpack.c.b16 %v106, %v105
    %123 = vmatpush.bf16.msra.mxu0 %v114
    %124 = vmatpush.bf16.msra.mxu0 %v113
    %125 = vmatpush.bf16.msra.mxu0 %v112
    %126 = vmatpush.bf16.msra.mxu0 %v111
    %127 = vmatpush.bf16.msra.mxu0 %v110
    %128 = vmatpush.bf16.msra.mxu0 %v109
    %129 = vmatpush.bf16.msra.mxu0 %v108
    %130 = vmatpush.bf16.msra.mxu0 %v107
    %131 = vmatmul.bf16.gmra.mxu0 %v73
    %v132 = vpop.f32.mrf.mxu0
    %v133 = vadd.f32 %v67, %v132
    %v134 = vpop.f32.mrf.mxu0
    %v135 = vadd.f32 %v67, %v134
    %136 = vdwg.mxu0
    %v137 = vxor.u32 %v133, 2147483648
    %v138 = vxor.u32 %v135, 2147483648
    %v139 = vmul.f32 %v137, 1.442695
    %v140 = vpow.pop %v139
    %v141 = vmul.f32 %v138, 1.442695
    %v142 = vpow.pop %v141
    %v143 = vadd.f32 %v140, 1.0
    %v144 = vadd.f32 %v142, 1.0
    %v145 = vrcp.pop %v143
    %v146 = vmul.f32 %v143, %v145
    %v147 = vsub.f32 1.0, %v146
    %v148 = vmul.f32 %v145, %v147
    %v149 = vadd.f32 %v145, %v148
    %vm150 = vweird.f32 %v143
    %vm151 = vweird.f32 %v145
    %vm152 = vmor %vm150, %vm151
    %v153 = vsel %vm152, %v145, %v149
    %v154 = vand.u32 2147483647, %v143
    %vm155 = vcmp.eq.f32.partialorder %v154, 8.507059e+37
    %v156 = vand.u32 %v143, 2147483648
    %v157 = vor.u32 1.1754944e-38, %v156
    %v158 = vsel %vm155, %v157, %v153
    %v159 = vmul.f32 1.0, %v158
    %v160 = vrcp.pop %v144
    %v161 = vmul.f32 %v144, %v160
    %v162 = vsub.f32 1.0, %v161
    %v163 = vmul.f32 %v160, %v162
    %v164 = vadd.f32 %v160, %v163
    %vm165 = vweird.f32 %v144
    %vm166 = vweird.f32 %v160
    %vm167 = vmor %vm165, %vm166
    %v168 = vsel %vm167, %v160, %v164
    %v169 = vand.u32 2147483647, %v144
    %vm170 = vcmp.eq.f32.partialorder %v169, 8.507059e+37
    %v171 = vand.u32 %v144, 2147483648
    %v172 = vor.u32 1.1754944e-38, %v171
    %v173 = vsel %vm170, %v172, %v168
    %v174 = vmul.f32 1.0, %v173
    %175 = vst [vmem:[#allocation7] sm:$0xff] %v159
    %176 = vst [vmem:[#allocation7 + $0x8] sm:$0xff] %v174
    // Predicated region
    $region22: #{tpu_custom_call.1} parent=1 // pred_check
      _
    $region23: #{tpu_custom_call.1} parent=1 // pred_check_branch
      %178 = sbr.rel (0) target = $region25
    $region24: #{tpu_custom_call.1} parent=1 // pred_region
      %180 = vsyncadd [#allocation4], 0
      %s181 = sshll.u32 [#allocation7], 4
      %s182 = int_to_ptr.vmem [resolvable:$true] %s181
      %s183 = sshll.u32 %s3, 4
      %s184 = int_to_ptr.hbm [resolvable:$true] %s183
      %189 = dma.vmem_to_hbm [thread:$0]  %s182, 256, %s184, [#allocation4], 128, 128, 8
    $region25: #{tpu_custom_call.1} parent=1 // pred_fallthru
      _
    // Predicated region
    $region26: #{tpu_custom_call.1} parent=1 // pred_check
      _
    $region27: #{tpu_custom_call.1} parent=1 // pred_check_branch
      %191 = sbr.rel (0) target = $region29
    $region28: #{tpu_custom_call.1} parent=1 // pred_region
      %193 = dma.done [#allocation4], 256
    $region29: #{tpu_custom_call.1} parent=1 // pred_fallthru
      _
    %194 = vsyncpa [#allocation3], 1
    %195 = vsyncpa [#allocation6], 1
    %196 = vsyncpa [#allocation4], 1

</llo_original>
